<compile_context>
chip_gen: v7x
topology: tpu7x:2x2x1
jax: 0.10.0
libtpu: 0.0.40
codegen_flags: <defaults>
</compile_context>

<pallas_src>
import functools

import jax
import jax.numpy as jnp
from jax import lax
from jax.experimental import pallas as pl
from jax.experimental.pallas import tpu as pltpu


def _round_up(x: int, m: int) -> int:
    return ((x + m - 1) // m) * m


def _vmem_capacity_bytes() -> int:
    """Per-core VMEM capacity; conservative fallback if the query fails."""
    try:
        return int(pltpu.get_tpu_info().vmem_capacity_bytes)
    except Exception:
        return 64 * 1024 * 1024  # v7x per-TC size (smallest of v5e/v6e/v7x)


def _clip_loss_kernel(z_ref, y_ref, out_ref, acc_ref, *, n_real: int, tn: int):
    # z_ref  : (tn,   tk)   compute dtype -- row block of Z (flattened F*T)
    # y_ref  : (n_pad, tk)  compute dtype -- all rows of Y (flattened F*T)
    # out_ref: (tn,   1)    f32           -- per-sample loss for this row block
    # acc_ref: (tn, n_pad)  f32           -- logits accumulator (persists over k)
    i = pl.program_id(0)  # row block   (parallel)
    k = pl.program_id(1)  # K tile      (arbitrary, last)

    @pl.when(k == 0)
    def _():
        acc_ref[...] = jnp.zeros_like(acc_ref)

    # S[i-block] += Z_tile @ Y_tile^T  (contract the flattened F*T dimension).
    acc_ref[...] += lax.dot_general(
        z_ref[...], y_ref[...],
        dimension_numbers=(((1,), (1,)), ((), ())),
        preferred_element_type=jnp.float32,
    )

    @pl.when(k == pl.num_programs(1) - 1)
    def _():
        S = acc_ref[...]                                      # (tn, n_pad) f32
        n_cols = S.shape[1]

        col_ids = lax.broadcasted_iota(jnp.int32, (tn, n_cols), 1)
        col_valid = col_ids < n_real
        row_ids = lax.broadcasted_iota(jnp.int32, (tn, 1), 0) + i * tn

        # Row-wise max-subtracted softmax over dim=1, exactly as in PyTorch.
        # Masking padded columns to -inf makes both the max and the exp correct
        # with a single select (exp(-inf - max) == 0 exactly).
        Sm = jnp.where(col_valid, S, -jnp.inf)
        row_max = jnp.max(Sm, axis=1, keepdims=True)
        E = jnp.exp(Sm - row_max)                             # padded cols -> 0
        inv_sum = pl.reciprocal(jnp.sum(E, axis=1, keepdims=True), approx=False)

        # F.cross_entropy(P, eye(N), 'sum') rows: logsumexp_j P[r,j] - P[r,r],
        # with P = E * inv_sum (softmax probs).  P is in [0,1], so the second
        # logsumexp needs no max-subtraction.  Padded columns are excluded.
        sum_exp_p = jnp.sum(jnp.where(col_valid, jnp.exp(E * inv_sum), 0.0),
                            axis=1, keepdims=True)            # (tn, 1)
        lse = jnp.log(sum_exp_p)

        # Diagonal P[r, i*tn + r]: pick it from the already-masked E (its column
        # is always a real column for real rows) -- no second full-width iota
        # and no materialized eye matrix.
        diag_e = jnp.sum(jnp.where(col_ids == row_ids, E, 0.0),
                         axis=1, keepdims=True)               # (tn, 1)
        diag_p = diag_e * inv_sum

        row_valid = row_ids < n_real
        out_ref[...] = jnp.where(row_valid, lse - diag_p, 0.0)


def clip_loss_orig(Y: jax.Array, Z: jax.Array, reduction: str = "sum", *,
                   tn: int | None = None, tk_max: int = 512,
                   compute_dtype=jnp.float32,
                   y_resident: bool | None = None) -> jax.Array:
    """Y, Z: (N, F, T). Returns scalar loss matching CLIPLossOrig.forward."""
    assert Y.shape == Z.shape and Y.ndim == 3
    N, F, T = Y.shape
    D = F * T
    itemsize = jnp.dtype(compute_dtype).itemsize

    if tn is None:
        tn = 256 if N > 256 else 128   # 256 fills the v6e/v7x MXU tile
    assert tn % 128 == 0

    n_pad = _round_up(max(N, tn), tn)
    d_pad = _round_up(D, 128)

    # VMEM budget / tile selection.
    capacity = max(_vmem_capacity_bytes(), 32 << 20)
    budget = int(0.7 * capacity)
    acc_bytes = tn * n_pad * 4
    epi_bytes = 4 * tn * n_pad * 4           # headroom for epilogue temporaries

    resident_bytes = (2 * (n_pad + tn) * d_pad) * itemsize + acc_bytes + epi_bytes
    if y_resident is None:
        y_resident = resident_bytes <= budget

    if y_resident:
        tk = d_pad                            # Y block index constant -> 1 DMA
    else:
        tk_hi = max(128, (min(tk_max, d_pad) // 128) * 128)
        cands = [c for c in range(128, tk_hi + 1, 128) if d_pad % c == 0]
        tk = 128
        for c in sorted(cands, reverse=True):
            if (2 * (n_pad + tn) * c) * itemsize + acc_bytes + epi_bytes <= budget:
                tk = c
                break

    num_i = n_pad // tn
    num_k = d_pad // tk

    # Cast (optionally to bf16 for the MXU) then pad only if actually needed.
    z = Z.reshape(N, D).astype(compute_dtype)
    y = Y.reshape(N, D).astype(compute_dtype)
    if (n_pad, d_pad) != (N, D):
        z = jnp.pad(z, ((0, n_pad - N), (0, d_pad - D)))
        y = jnp.pad(y, ((0, n_pad - N), (0, d_pad - D)))

    est_bytes = (2 * (n_pad + tn) * tk) * itemsize + acc_bytes + epi_bytes
    vmem_limit = int(min(0.98 * capacity, max(est_bytes + (8 << 20), 32 << 20)))

    kernel = functools.partial(_clip_loss_kernel, n_real=N, tn=tn)

    per_row = pl.pallas_call(
        kernel,
        out_shape=jax.ShapeDtypeStruct((n_pad, 1), jnp.float32),
        grid_spec=pltpu.PrefetchScalarGridSpec(
            num_scalar_prefetch=0,
            grid=(num_i, num_k),
            in_specs=[
                pl.BlockSpec((tn, tk), lambda i, k: (i, k)),      # Z row block
                pl.BlockSpec((n_pad, tk), lambda i, k: (0, k)),   # all Y rows
            ],
            out_specs=pl.BlockSpec((tn, 1), lambda i, k: (i, 0)),
            scratch_shapes=[pltpu.VMEM((tn, n_pad), jnp.float32)],
        ),
        compiler_params=pltpu.CompilerParams(
            dimension_semantics=("parallel", "arbitrary"),
            vmem_limit_bytes=vmem_limit,
        ),
        cost_estimate=pl.CostEstimate(
            flops=2 * n_pad * n_pad * d_pad,
            transcendentals=2 * n_pad * n_pad,
            bytes_accessed=(n_pad * d_pad * itemsize                       # Z
                            + (1 if y_resident else num_i)
                            * n_pad * d_pad * itemsize                     # Y
                            + n_pad * 4),                                  # out
        ),
    )(z, y)

    loss = jnp.sum(per_row)  # padded rows contribute exactly 0
    if reduction == "mean":
        loss = loss / N
    return loss


def _reference_loss(Y, Z, reduction="sum"):
    """Pure-JAX reference mirroring the PyTorch forward exactly."""
    probs = jnp.einsum("bft,nft->bn", Z, Y)
    probs = (probs.T - probs.max(axis=1)).T
    probs = jnp.exp(probs)
    probs = (probs.T / probs.sum(axis=1)).T
    logp = probs - jax.scipy.special.logsumexp(probs, axis=1, keepdims=True)
    per_sample = -jnp.diag(logp)
    return per_sample.sum() if reduction == "sum" else per_sample.mean()


if __name__ == "__main__":
    key = jax.random.PRNGKey(0)
    kY, kZ = jax.random.split(key)

    # Small shapes consistent with (N, F, T) latents.
    N, F, T = 8, 4, 16
    Y = jax.random.normal(kY, (N, F, T), dtype=jnp.float32)
    Z = jax.random.normal(kZ, (N, F, T), dtype=jnp.float32)
    ref = jax.block_until_ready(_reference_loss(Y, Z, "sum"))

    # 1) Default f32 path (Y resident, single K tile): exact vs. f32 reference.
    loss = jax.block_until_ready(clip_loss_orig(Y, Z, "sum"))
    assert jnp.allclose(loss, ref, rtol=1e-5, atol=1e-5), (loss, ref)

    # 2) Streamed-Y / multi-K-tile path (exercises the accumulator loop).
    N2, F2, T2 = 8, 4, 96
    Y2 = jax.random.normal(kY, (N2, F2, T2), dtype=jnp.float32)
    Z2 = jax.random.normal(kZ, (N2, F2, T2), dtype=jnp.float32)
    ref2 = jax.block_until_ready(_reference_loss(Y2, Z2, "sum"))
    loss2 = jax.block_until_ready(
        clip_loss_orig(Y2, Z2, "sum", tk_max=128, y_resident=False))
    assert jnp.allclose(loss2, ref2, rtol=1e-5, atol=1e-5), (loss2, ref2)

    # 3) bf16-MXU path (perf-review item): f32 accumulation/epilogue, loose tol.
    loss_bf16 = jax.block_until_ready(
        clip_loss_orig(Y, Z, "sum", compute_dtype=jnp.bfloat16))
    assert jnp.allclose(loss_bf16, ref, rtol=0.2, atol=0.2), (loss_bf16, ref)

    print("KERNEL_OK")
</pallas_src>

<mosaic_0001>
module attributes {stable_mosaic.version = 11 : i64} {
  func.func @_clip_loss_kernel(%arg0: i32, %arg1: i32, %arg2: memref<128x128xf32, #tpu.memory_space<vmem>>, %arg3: memref<128x128xf32, #tpu.memory_space<vmem>>, %arg4: memref<128x1xf32, #tpu.memory_space<vmem>>, %arg5: memref<128x128xf32, #tpu.memory_space<vmem>>) attributes {dimension_semantics = [#tpu.dimension_semantics<parallel>, #tpu.dimension_semantics<arbitrary>], iteration_bounds = array<i64: 1, 1>, scalar_prefetch = 0 : i64, scratch_operands = 1 : i64, tpu.core_type = #tpu.core_type<tc>, window_params = [{transform_indices = @transform_0, window_bounds = array<i64: 128, 128>}, {transform_indices = @transform_1, window_bounds = array<i64: 128, 128>}, {transform_indices = @transform_2, window_bounds = array<i64: 128, 1>}]} {
    %c0_i32 = arith.constant 0 : i32
    %0 = arith.cmpi eq, %arg1, %c0_i32 : i32
    %1 = arith.extui %0 : i1 to i32
    %c0_i32_0 = arith.constant 0 : i32
    %2 = arith.cmpi ne, %1, %c0_i32_0 : i32
    scf.if %2 {
      %cst_10 = arith.constant 0.000000e+00 : f32
      %12 = vector.broadcast %cst_10 : f32 to vector<128x128xf32>
      %c0_11 = arith.constant 0 : index
      %c0_12 = arith.constant 0 : index
      %13 = vector.load %arg5[%c0_11, %c0_12] : memref<128x128xf32, #tpu.memory_space<vmem>>, vector<128x128xf32>
      tpu.vector_store %arg5[%c0_11, %c0_12], %12 {strides = array<i32>} : memref<128x128xf32, #tpu.memory_space<vmem>>, vector<128x128xf32>,
    } else {
    }
    %c0 = arith.constant 0 : index
    %c0_1 = arith.constant 0 : index
    %3 = vector.load %arg5[%c0, %c0_1] : memref<128x128xf32, #tpu.memory_space<vmem>>, vector<128x128xf32>
    %c0_2 = arith.constant 0 : index
    %c0_3 = arith.constant 0 : index
    %4 = vector.load %arg2[%c0_2, %c0_3] : memref<128x128xf32, #tpu.memory_space<vmem>>, vector<128x128xf32>
    %c0_4 = arith.constant 0 : index
    %c0_5 = arith.constant 0 : index
    %5 = vector.load %arg3[%c0_4, %c0_5] : memref<128x128xf32, #tpu.memory_space<vmem>>, vector<128x128xf32>
    %cst = arith.constant dense<0.000000e+00> : vector<128x128xf32>
    %6 = tpu.matmul %4, %5, %cst {dimension_numbers = #tpu.dot_dimension_numbers<[1], [1], [0], [0], [0, 0, 1, 0], [], []>} : vector<128x128xf32>, vector<128x128xf32>, vector<128x128xf32> -> vector<128x128xf32>
    %7 = arith.addf %3, %6 : vector<128x128xf32>
    %c0_6 = arith.constant 0 : index
    %c0_7 = arith.constant 0 : index
    %8 = vector.load %arg5[%c0_6, %c0_7] : memref<128x128xf32, #tpu.memory_space<vmem>>, vector<128x128xf32>
    tpu.vector_store %arg5[%c0_6, %c0_7], %7 {strides = array<i32>} : memref<128x128xf32, #tpu.memory_space<vmem>>, vector<128x128xf32>,
    %c0_i32_8 = arith.constant 0 : i32
    %9 = arith.cmpi eq, %arg1, %c0_i32_8 : i32
    %10 = arith.extui %9 : i1 to i32
    %c0_i32_9 = arith.constant 0 : i32
    %11 = arith.cmpi ne, %10, %c0_i32_9 : i32
    scf.if %11 {
      %c0_10 = arith.constant 0 : index
      %c0_11 = arith.constant 0 : index
      %12 = vector.load %arg5[%c0_10, %c0_11] : memref<128x128xf32, #tpu.memory_space<vmem>>, vector<128x128xf32>
      %13 = tpu.iota {dimensions = array<i32: 1>} : vector<128x128xi32>
      %c8_i32 = arith.constant 8 : i32
      %14 = vector.broadcast %c8_i32 : i32 to vector<128x128xi32>
      %15 = arith.cmpi slt, %13, %14 : vector<128x128xi32>
      %16 = tpu.iota {dimensions = array<i32: 0>} : vector<128x1xi32>
      %c128_i32 = arith.constant 128 : i32
      %17 = arith.muli %arg0, %c128_i32 : i32
      %18 = vector.broadcast %17 : i32 to vector<128x1xi32>
      %19 = arith.addi %16, %18 : vector<128x1xi32>
      %cst_12 = arith.constant 0xFF800000 : f32
      %20 = vector.broadcast %cst_12 : f32 to vector<128x128xf32>
      %21 = arith.select %15, %12, %20 : vector<128x128xi1>, vector<128x128xf32>
      %cst_13 = arith.constant dense<0xFF800000> : vector<128xf32>
      %22 = vector.multi_reduction <maximumf>, %21, %cst_13 [1] : vector<128x128xf32> to vector<128xf32>
      %23 = vector.shape_cast %22 : vector<128xf32> to vector<128x1xf32>
      %24 = vector.broadcast %23 : vector<128x1xf32> to vector<128x128xf32>
      %25 = arith.subf %21, %24 : vector<128x128xf32>
      %26 = math.exp %25 : vector<128x128xf32>
      %cst_14 = arith.constant dense<0.000000e+00> : vector<128xf32>
      %27 = vector.multi_reduction <add>, %26, %cst_14 [1] : vector<128x128xf32> to vector<128xf32>
      %28 = vector.shape_cast %27 : vector<128xf32> to vector<128x1xf32>
      %29 = tpu.reciprocal %28 : vector<128x1xf32> -> vector<128x1xf32>
      %30 = vector.broadcast %29 : vector<128x1xf32> to vector<128x128xf32>
      %31 = arith.mulf %26, %30 : vector<128x128xf32>
      %32 = math.exp %31 : vector<128x128xf32>
      %cst_15 = arith.constant 0.000000e+00 : f32
      %33 = vector.broadcast %cst_15 : f32 to vector<128x128xf32>
      %34 = arith.select %15, %32, %33 : vector<128x128xi1>, vector<128x128xf32>
      %cst_16 = arith.constant dense<0.000000e+00> : vector<128xf32>
      %35 = vector.multi_reduction <add>, %34, %cst_16 [1] : vector<128x128xf32> to vector<128xf32>
      %36 = vector.shape_cast %35 : vector<128xf32> to vector<128x1xf32>
      %37 = math.log %36 : vector<128x1xf32>
      %38 = vector.broadcast %19 : vector<128x1xi32> to vector<128x128xi32>
      %39 = arith.cmpi eq, %13, %38 : vector<128x128xi32>
      %cst_17 = arith.constant 0.000000e+00 : f32
      %40 = vector.broadcast %cst_17 : f32 to vector<128x128xf32>
      %41 = arith.select %39, %26, %40 : vector<128x128xi1>, vector<128x128xf32>
      %cst_18 = arith.constant dense<0.000000e+00> : vector<128xf32>
      %42 = vector.multi_reduction <add>, %41, %cst_18 [1] : vector<128x128xf32> to vector<128xf32>
      %43 = vector.shape_cast %42 : vector<128xf32> to vector<128x1xf32>
      %44 = arith.mulf %43, %29 : vector<128x1xf32>
      %c8_i32_19 = arith.constant 8 : i32
      %45 = vector.broadcast %c8_i32_19 : i32 to vector<128x1xi32>
      %46 = arith.cmpi slt, %19, %45 : vector<128x1xi32>
      %47 = arith.subf %37, %44 : vector<128x1xf32>
      %cst_20 = arith.constant 0.000000e+00 : f32
      %48 = vector.broadcast %cst_20 : f32 to vector<128x1xf32>
      %49 = arith.select %46, %47, %48 : vector<128x1xi1>, vector<128x1xf32>
      %c0_21 = arith.constant 0 : index
      %c0_22 = arith.constant 0 : index
      %50 = vector.load %arg4[%c0_21, %c0_22] : memref<128x1xf32, #tpu.memory_space<vmem>>, vector<128x1xf32>
      tpu.vector_store %arg4[%c0_21, %c0_22], %49 {strides = array<i32>} : memref<128x1xf32, #tpu.memory_space<vmem>>, vector<128x1xf32>,
    } else {
    }
    return
  }
  func.func @transform_0(%arg0: i32, %arg1: i32) -> (i32, i32) {
    %c0_i32 = arith.constant 0 : i32
    return %arg0, %arg1 : i32, i32
  }
  func.func @transform_1(%arg0: i32, %arg1: i32) -> (i32, i32) {
    %c0_i32 = arith.constant 0 : i32
    %c0_i32_0 = arith.constant 0 : i32
    return %c0_i32, %arg1 : i32, i32
  }
  func.func @transform_2(%arg0: i32, %arg1: i32) -> (i32, i32) {
    %c0_i32 = arith.constant 0 : i32
    %c0_i32_0 = arith.constant 0 : i32
    return %arg0, %c0_i32 : i32, i32
  }
}

</mosaic_0001>

<llo_original>
// kernel: tpu_custom_call.1
$region0: #{tpu_custom_call.1}
  #allocation0 [shape = 'u32[]', space=smem, size = 0x4, offset = 0x4, fixed_abs, tag = 'smem constant byte address 0x4 - core index']
  #allocation1 [shape = 'u32[144,128]{1,0:T(1,128)}', space=vmem, size = 0x12000, scoped, tag = 'internal scratch']
  #allocation2 [shape = 'f32[128,128]{1,0:T(8,128)}', space=vmem, size = 0x10000, scoped, tag = 'scratch operand']
  %s0 = inlined_call_operand.hbm [shape: f32[128,128], index: 0, kind: input, shape index: {}]
  %s1 = inlined_call_operand.hbm [shape: f32[128,128], index: 1, kind: input, shape index: {}]
  %s2 = inlined_call_operand.vmem [shape: f32[128,1], index: 2, kind: output, shape index: {}]
  %s3 = sld [smem:[#allocation0]]
  $region34: #{tpu_custom_call.1} parent=0
    _
  %s5 = ssub.s32 1, %s3
  %s6 = scalar_select 0, %s5, %s3
  $region1: #{tpu_custom_call.1} parent=0
    #allocation3 [shape = 'u8[65536]{0}', space=vmem, size = 0x10000, scoped, tag = 'input window, operand 0, single buffered']
    #allocation4 [shape = 's32[1]{0}', space=sflag, size = 0x4, scoped, tag = 'scoped memory for tpu_custom_call.1']
    #allocation5 [shape = 'u8[65536]{0}', space=vmem, size = 0x10000, scoped, tag = 'input window, operand 1, single buffered']
    #allocation6 [shape = 's32[1]{0}', space=sflag, size = 0x4, scoped, tag = 'scoped memory for tpu_custom_call.1']
    %7 = vsyncpa [#allocation4], 0
    %8 = vsyncpa [#allocation6], 0
    // Predicated region
    $region2: #{tpu_custom_call.1} parent=1 // pred_check
      _
    $region3: #{tpu_custom_call.1} parent=1 // pred_check_branch
      %10 = sbr.rel (0) target = $region5
    $region4: #{tpu_custom_call.1} parent=1 // pred_region
      %s12 = ssub.s32 2048, 2048
      %13 = vsyncadd [#allocation4], %s12
      %s14 = sshll.u32 [#allocation3], 4
      %s15 = int_to_ptr.vmem [resolvable:$true] %s14
      %20 = dma.hbm_to_vmem [thread:$0]  %s0, 2048, %s15, [#allocation4], 128, 128, 8
    $region5: #{tpu_custom_call.1} parent=1 // pred_fallthru
      _
    // Predicated region
    $region6: #{tpu_custom_call.1} parent=1 // pred_check
      _
    $region7: #{tpu_custom_call.1} parent=1 // pred_check_branch
      %22 = sbr.rel (0) target = $region9
    $region8: #{tpu_custom_call.1} parent=1 // pred_region
      %s24 = ssub.s32 2048, 2048
      %25 = vsyncadd [#allocation6], %s24
      %s26 = sshll.u32 [#allocation5], 4
      %s27 = int_to_ptr.vmem [resolvable:$true] %s26
      %32 = dma.hbm_to_vmem [thread:$0]  %s1, 2048, %s27, [#allocation6], 128, 128, 8
    $region9: #{tpu_custom_call.1} parent=1 // pred_fallthru
      _
    // Predicated region
    $region10: #{tpu_custom_call.1} parent=1 // pred_check
      _
    $region11: #{tpu_custom_call.1} parent=1 // pred_check_branch
      %34 = sbr.rel (0) target = $region13
    $region12: #{tpu_custom_call.1} parent=1 // pred_region
      %35 = dma.done [#allocation4], 2048
    $region13: #{tpu_custom_call.1} parent=1 // pred_fallthru
      _
    // Predicated region
    $region14: #{tpu_custom_call.1} parent=1 // pred_check
      _
    $region15: #{tpu_custom_call.1} parent=1 // pred_check_branch
      %37 = sbr.rel (0) target = $region17
    $region16: #{tpu_custom_call.1} parent=1 // pred_region
      %38 = dma.done [#allocation6], 2048
    $region17: #{tpu_custom_call.1} parent=1 // pred_fallthru
      _
    %p39 = scmp.eq.s32.totalorder 0, 0
    // Predicated region
    $region18: #{tpu_custom_call.1} parent=1 // pred_check
      %p40 = pneg %p39
    $region19: #{tpu_custom_call.1} parent=1 // pred_check_branch
      %42 = sbr.rel (%p40) target = $region21
    $region20: #{tpu_custom_call.1} parent=1 // pred_region
      %43 = vst [vmem:[#allocation2] sm:$0xff] 0.0
      %44 = vst [vmem:[#allocation2 + $0x8] sm:$0xff] 0.0
      %45 = vst [vmem:[#allocation2 + $0x10] sm:$0xff] 0.0
      %46 = vst [vmem:[#allocation2 + $0x18] sm:$0xff] 0.0
      %47 = vst [vmem:[#allocation2 + $0x20] sm:$0xff] 0.0
      %48 = vst [vmem:[#allocation2 + $0x28] sm:$0xff] 0.0
      %49 = vst [vmem:[#allocation2 + $0x30] sm:$0xff] 0.0
      %50 = vst [vmem:[#allocation2 + $0x38] sm:$0xff] 0.0
      %51 = vst [vmem:[#allocation2 + $0x40] sm:$0xff] 0.0
      %52 = vst [vmem:[#allocation2 + $0x48] sm:$0xff] 0.0
      %53 = vst [vmem:[#allocation2 + $0x50] sm:$0xff] 0.0
      %54 = vst [vmem:[#allocation2 + $0x58] sm:$0xff] 0.0
      %55 = vst [vmem:[#allocation2 + $0x60] sm:$0xff] 0.0
      %56 = vst [vmem:[#allocation2 + $0x68] sm:$0xff] 0.0
      %57 = vst [vmem:[#allocation2 + $0x70] sm:$0xff] 0.0
      %58 = vst [vmem:[#allocation2 + $0x78] sm:$0xff] 0.0
    $region21: #{tpu_custom_call.1} parent=1 // pred_fallthru
      _
    %v59 = vld [vmem:[#allocation2] sm:$0xff]
    %v60 = vld [vmem:[#allocation2 + $0x8] sm:$0xff]
    %v61 = vld [vmem:[#allocation2 + $0x10] sm:$0xff]
    %v62 = vld [vmem:[#allocation2 + $0x18] sm:$0xff]
    %v63 = vld [vmem:[#allocation2 + $0x20] sm:$0xff]
    %v64 = vld [vmem:[#allocation2 + $0x28] sm:$0xff]
    %v65 = vld [vmem:[#allocation2 + $0x30] sm:$0xff]
    %v66 = vld [vmem:[#allocation2 + $0x38] sm:$0xff]
    %v67 = vld [vmem:[#allocation2 + $0x40] sm:$0xff]
    %v68 = vld [vmem:[#allocation2 + $0x48] sm:$0xff]
    %v69 = vld [vmem:[#allocation2 + $0x50] sm:$0xff]
    %v70 = vld [vmem:[#allocation2 + $0x58] sm:$0xff]
    %v71 = vld [vmem:[#allocation2 + $0x60] sm:$0xff]
    %v72 = vld [vmem:[#allocation2 + $0x68] sm:$0xff]
    %v73 = vld [vmem:[#allocation2 + $0x70] sm:$0xff]
    %v74 = vld [vmem:[#allocation2 + $0x78] sm:$0xff]
    %v75 = vld [vmem:[#allocation3] sm:$0xff]
    %v76 = vld [vmem:[#allocation3 + $0x8] sm:$0xff]
    %v77 = vld [vmem:[#allocation3 + $0x10] sm:$0xff]
    %v78 = vld [vmem:[#allocation3 + $0x18] sm:$0xff]
    %v79 = vld [vmem:[#allocation3 + $0x20] sm:$0xff]
    %v80 = vld [vmem:[#allocation3 + $0x28] sm:$0xff]
    %v81 = vld [vmem:[#allocation3 + $0x30] sm:$0xff]
    %v82 = vld [vmem:[#allocation3 + $0x38] sm:$0xff]
    %v83 = vld [vmem:[#allocation3 + $0x40] sm:$0xff]
    %v84 = vld [vmem:[#allocation3 + $0x48] sm:$0xff]
    %v85 = vld [vmem:[#allocation3 + $0x50] sm:$0xff]
    %v86 = vld [vmem:[#allocation3 + $0x58] sm:$0xff]
    %v87 = vld [vmem:[#allocation3 + $0x60] sm:$0xff]
    %v88 = vld [vmem:[#allocation3 + $0x68] sm:$0xff]
    %v89 = vld [vmem:[#allocation3 + $0x70] sm:$0xff]
    %v90 = vld [vmem:[#allocation3 + $0x78] sm:$0xff]
    %v91 = vld [vmem:[#allocation5] sm:$0xff]
    %v92 = vld [vmem:[#allocation5 + $0x8] sm:$0xff]
    %v93 = vld [vmem:[#allocation5 + $0x10] sm:$0xff]
    %v94 = vld [vmem:[#allocation5 + $0x18] sm:$0xff]
    %v95 = vld [vmem:[#allocation5 + $0x20] sm:$0xff]
    %v96 = vld [vmem:[#allocation5 + $0x28] sm:$0xff]
    %v97 = vld [vmem:[#allocation5 + $0x30] sm:$0xff]
    %v98 = vld [vmem:[#allocation5 + $0x38] sm:$0xff]
    %v99 = vld [vmem:[#allocation5 + $0x40] sm:$0xff]
    %v100 = vld [vmem:[#allocation5 + $0x48] sm:$0xff]
    %v101 = vld [vmem:[#allocation5 + $0x50] sm:$0xff]
    %v102 = vld [vmem:[#allocation5 + $0x58] sm:$0xff]
    %v103 = vld [vmem:[#allocation5 + $0x60] sm:$0xff]
    %v104 = vld [vmem:[#allocation5 + $0x68] sm:$0xff]
    %v105 = vld [vmem:[#allocation5 + $0x70] sm:$0xff]
    %v106 = vld [vmem:[#allocation5 + $0x78] sm:$0xff]
    %107 = vmatprep.subr.mxu0 0.0
    %108 = vmatpush1.xpose.msra.mxu0 %v91
    %109 = vmatprep.subr.mxu0 0.0
    %110 = vmatpush1.xpose.msra.mxu0 %v92
    %111 = vmatprep.subr.mxu0 0.0
    %112 = vmatpush1.xpose.msra.mxu0 %v93
    %113 = vmatprep.subr.mxu0 0.0
    %114 = vmatpush1.xpose.msra.mxu0 %v94
    %115 = vmatprep.subr.mxu0 0.0
    %116 = vmatpush1.xpose.msra.mxu0 %v95
    %117 = vmatprep.subr.mxu0 0.0
    %118 = vmatpush1.xpose.msra.mxu0 %v96
    %119 = vmatprep.subr.mxu0 0.0
    %120 = vmatpush1.xpose.msra.mxu0 %v97
    %121 = vmatprep.subr.mxu0 0.0
    %122 = vmatpush1.xpose.msra.mxu0 %v98
    %123 = vmatprep.subr.mxu0 0.0
    %124 = vmatpush1.xpose.msra.mxu0 %v99
    %125 = vmatprep.subr.mxu0 0.0
    %126 = vmatpush1.xpose.msra.mxu0 %v100
    %127 = vmatprep.subr.mxu0 0.0
    %128 = vmatpush1.xpose.msra.mxu0 %v101
    %129 = vmatprep.subr.mxu0 0.0
    %130 = vmatpush1.xpose.msra.mxu0 %v102
    %131 = vmatprep.subr.mxu0 0.0
    %132 = vmatpush1.xpose.msra.mxu0 %v103
    %133 = vmatprep.subr.mxu0 0.0
    %134 = vmatpush1.xpose.msra.mxu0 %v104
    %135 = vmatprep.subr.mxu0 0.0
    %136 = vmatpush1.xpose.msra.mxu0 %v105
    %137 = vmatprep.subr.mxu0 0.0
    %138 = vmatpush1.xpose.msra.mxu0 %v106
    %139 = vmatprep.subr.mxu0 0.0
    %140 = vmatpush1.xpose.msra.mxu0 0.0
    %141 = vmatprep.subr.mxu0 0.0
    %142 = vmatpush1.xpose.msra.mxu0 0.0
    %143 = vmatprep.subr.mxu0 0.0
    %144 = vmatpush1.xpose.msra.mxu0 0.0
    %145 = vmatprep.subr.mxu0 0.0
    %146 = vmatpush1.xpose.msra.mxu0 0.0
    %147 = vmatprep.subr.mxu0 0.0
    %148 = vmatpush1.xpose.msra.mxu0 0.0
    %149 = vmatprep.subr.mxu0 0.0
    %150 = vmatpush1.xpose.msra.mxu0 0.0
    %151 = vmatprep.subr.mxu0 0.0
    %152 = vmatpush1.xpose.msra.mxu0 0.0
    %153 = vmatprep.subr.mxu0 0.0
    %154 = vmatpush1.xpose.msra.mxu0 0.0
    %155 = vmatprep.subr.mxu0 0.0
    %156 = vmatpush1.xpose.msra.mxu0 0.0
    %157 = vmatprep.subr.mxu0 0.0
    %158 = vmatpush1.xpose.msra.mxu0 0.0
    %159 = vmatprep.subr.mxu0 0.0
    %160 = vmatpush1.xpose.msra.mxu0 0.0
    %161 = vmatprep.subr.mxu0 0.0
    %162 = vmatpush1.xpose.msra.mxu0 0.0
    %163 = vmatprep.subr.mxu0 0.0
    %164 = vmatpush1.xpose.msra.mxu0 0.0
    %165 = vmatprep.subr.mxu0 0.0
    %166 = vmatpush1.xpose.msra.mxu0 0.0
    %167 = vmatprep.subr.mxu0 0.0
    %168 = vmatpush1.xpose.msra.mxu0 0.0
    %169 = vmatprep.subr.mxu0 0.0
    %170 = vmatpush1.xpose.msra.mxu0 0.0
    %171 = vmatprep.mubr.f32.mxu0 0.0
    %172 = vmatmul.mubr.f32.gmra.mrb[0].mxu0 %v75
    %v173 = vpop.f32.mrb[0].mxu0
    %v174 = vadd.f32 0.0, %v173
    %v175 = vpop.f32.mrb[0].mxu0
    %176 = vmatprep.mubr.f32.mxu0 0.0
    %177 = vmatmul.mubr.f32.gmra.mrb[0].mxu0 %v76
    %v178 = vpop.f32.mrb[0].mxu0
    %v179 = vadd.f32 0.0, %v178
    %v180 = vpop.f32.mrb[0].mxu0
    %181 = vmatprep.mubr.f32.mxu0 0.0
    %182 = vmatmul.mubr.f32.gmra.mrb[0].mxu0 %v77
    %v183 = vpop.f32.mrb[0].mxu0
    %v184 = vadd.f32 0.0, %v183
    %v185 = vpop.f32.mrb[0].mxu0
    %186 = vmatprep.mubr.f32.mxu0 0.0
    %187 = vmatmul.mubr.f32.gmra.mrb[0].mxu0 %v78
    %v188 = vpop.f32.mrb[0].mxu0
    %v189 = vadd.f32 0.0, %v188
    %v190 = vpop.f32.mrb[0].mxu0
    %191 = vmatprep.mubr.f32.mxu0 0.0
    %192 = vmatmul.mubr.f32.gmra.mrb[0].mxu0 %v79
    %v193 = vpop.f32.mrb[0].mxu0
    %v194 = vadd.f32 0.0, %v193
    %v195 = vpop.f32.mrb[0].mxu0
    %196 = vmatprep.mubr.f32.mxu0 0.0
    %197 = vmatmul.mubr.f32.gmra.mrb[0].mxu0 %v80
    %v198 = vpop.f32.mrb[0].mxu0
    %v199 = vadd.f32 0.0, %v198
    %v200 = vpop.f32.mrb[0].mxu0
    %201 = vmatprep.mubr.f32.mxu0 0.0
    %202 = vmatmul.mubr.f32.gmra.mrb[0].mxu0 %v81
    %v203 = vpop.f32.mrb[0].mxu0
    %v204 = vadd.f32 0.0, %v203
    %v205 = vpop.f32.mrb[0].mxu0
    %206 = vmatprep.mubr.f32.mxu0 0.0
    %207 = vmatmul.mubr.f32.gmra.mrb[0].mxu0 %v82
    %v208 = vpop.f32.mrb[0].mxu0
    %v209 = vadd.f32 0.0, %v208
    %v210 = vpop.f32.mrb[0].mxu0
    %211 = vmatprep.mubr.f32.mxu0 0.0
    %212 = vmatmul.mubr.f32.gmra.mrb[0].mxu0 %v83
    %v213 = vpop.f32.mrb[0].mxu0
    %v214 = vadd.f32 0.0, %v213
    %v215 = vpop.f32.mrb[0].mxu0
    %216 = vmatprep.mubr.f32.mxu0 0.0
    %217 = vmatmul.mubr.f32.gmra.mrb[0].mxu0 %v84
    %v218 = vpop.f32.mrb[0].mxu0
    %v219 = vadd.f32 0.0, %v218
    %v220 = vpop.f32.mrb[0].mxu0
    %221 = vmatprep.mubr.f32.mxu0 0.0
    %222 = vmatmul.mubr.f32.gmra.mrb[0].mxu0 %v85
    %v223 = vpop.f32.mrb[0].mxu0
    %v224 = vadd.f32 0.0, %v223
    %v225 = vpop.f32.mrb[0].mxu0
    %226 = vmatprep.mubr.f32.mxu0 0.0
    %227 = vmatmul.mubr.f32.gmra.mrb[0].mxu0 %v86
    %v228 = vpop.f32.mrb[0].mxu0
    %v229 = vadd.f32 0.0, %v228
    %v230 = vpop.f32.mrb[0].mxu0
    %231 = vmatprep.mubr.f32.mxu0 0.0
    %232 = vmatmul.mubr.f32.gmra.mrb[0].mxu0 %v87
    %v233 = vpop.f32.mrb[0].mxu0
    %v234 = vadd.f32 0.0, %v233
    %v235 = vpop.f32.mrb[0].mxu0
    %236 = vmatprep.mubr.f32.mxu0 0.0
    %237 = vmatmul.mubr.f32.gmra.mrb[0].mxu0 %v88
    %v238 = vpop.f32.mrb[0].mxu0
    %v239 = vadd.f32 0.0, %v238
    %v240 = vpop.f32.mrb[0].mxu0
    %241 = vmatprep.mubr.f32.mxu0 0.0
    %242 = vmatmul.mubr.f32.gmra.mrb[0].mxu0 %v89
    %v243 = vpop.f32.mrb[0].mxu0
    %v244 = vadd.f32 0.0, %v243
    %v245 = vpop.f32.mrb[0].mxu0
    %246 = vmatprep.mubr.f32.mxu0 0.0
    %247 = vmatmul.mubr.f32.gmra.mrb[0].mxu0 %v90
    %v248 = vpop.f32.mrb[0].mxu0
    %v249 = vadd.f32 0.0, %v248
    %v250 = vpop.f32.mrb[0].mxu0
    %251 = vdwg.mxu0
    %v252 = vadd.f32 %v59, %v174
    %v253 = vadd.f32 %v60, %v179
    %v254 = vadd.f32 %v61, %v184
    %v255 = vadd.f32 %v62, %v189
    %v256 = vadd.f32 %v63, %v194
    %v257 = vadd.f32 %v64, %v199
    %v258 = vadd.f32 %v65, %v204
    %v259 = vadd.f32 %v66, %v209
    %v260 = vadd.f32 %v67, %v214
    %v261 = vadd.f32 %v68, %v219
    %v262 = vadd.f32 %v69, %v224
    %v263 = vadd.f32 %v70, %v229
    %v264 = vadd.f32 %v71, %v234
    %v265 = vadd.f32 %v72, %v239
    %v266 = vadd.f32 %v73, %v244
    %v267 = vadd.f32 %v74, %v249
    %268 = vst [vmem:[#allocation2] sm:$0xff] %v252
    %269 = vst [vmem:[#allocation2 + $0x8] sm:$0xff] %v253
    %270 = vst [vmem:[#allocation2 + $0x10] sm:$0xff] %v254
    %271 = vst [vmem:[#allocation2 + $0x18] sm:$0xff] %v255
    %272 = vst [vmem:[#allocation2 + $0x20] sm:$0xff] %v256
    %273 = vst [vmem:[#allocation2 + $0x28] sm:$0xff] %v257
    %274 = vst [vmem:[#allocation2 + $0x30] sm:$0xff] %v258
    %275 = vst [vmem:[#allocation2 + $0x38] sm:$0xff] %v259
    %276 = vst [vmem:[#allocation2 + $0x40] sm:$0xff] %v260
    %277 = vst [vmem:[#allocation2 + $0x48] sm:$0xff] %v261
    %278 = vst [vmem:[#allocation2 + $0x50] sm:$0xff] %v262
    %279 = vst [vmem:[#allocation2 + $0x58] sm:$0xff] %v263
    %280 = vst [vmem:[#allocation2 + $0x60] sm:$0xff] %v264
    %281 = vst [vmem:[#allocation2 + $0x68] sm:$0xff] %v265
    %282 = vst [vmem:[#allocation2 + $0x70] sm:$0xff] %v266
    %283 = vst [vmem:[#allocation2 + $0x78] sm:$0xff] %v267
    // Predicated region
    $region22: #{tpu_custom_call.1} parent=1 // pred_check
      %p284 = pneg %p39
    $region23: #{tpu_custom_call.1} parent=1 // pred_check_branch
      %286 = sbr.rel (%p284) target = $region25
    $region24: #{tpu_custom_call.1} parent=1 // pred_region
      %v287 = vld [vmem:[#allocation2] sm:$0xff]
      %v288 = vld [vmem:[#allocation2 + $0x8] sm:$0xff]
      %v289 = vld [vmem:[#allocation2 + $0x10] sm:$0xff]
      %v290 = vld [vmem:[#allocation2 + $0x18] sm:$0xff]
      %v291 = vld [vmem:[#allocation2 + $0x20] sm:$0xff]
      %v292 = vld [vmem:[#allocation2 + $0x28] sm:$0xff]
      %v293 = vld [vmem:[#allocation2 + $0x30] sm:$0xff]
      %v294 = vld [vmem:[#allocation2 + $0x38] sm:$0xff]
      %v295 = vld [vmem:[#allocation2 + $0x40] sm:$0xff]
      %v296 = vld [vmem:[#allocation2 + $0x48] sm:$0xff]
      %v297 = vld [vmem:[#allocation2 + $0x50] sm:$0xff]
      %v298 = vld [vmem:[#allocation2 + $0x58] sm:$0xff]
      %v299 = vld [vmem:[#allocation2 + $0x60] sm:$0xff]
      %v300 = vld [vmem:[#allocation2 + $0x68] sm:$0xff]
      %v301 = vld [vmem:[#allocation2 + $0x70] sm:$0xff]
      %v302 = vld [vmem:[#allocation2 + $0x78] sm:$0xff]
      %v303 = vlaneseq
      %v304 = vand.u32 %v303, 127
      %vm305 = vcmp.lt.s32.totalorder %v304, 8
      %v306 = vlaneseq
      %v307 = vshrl.u32 %v306, 7
      %v308 = vadd.s32 %v307, 8
      %v309 = vadd.s32 %v307, 16
      %v310 = vadd.s32 %v307, 24
      %v311 = vadd.s32 %v307, 32
      %v312 = vadd.s32 %v307, 40
      %v313 = vadd.s32 %v307, 48
      %v314 = vadd.s32 %v307, 56
      %v315 = vadd.s32 %v307, 64
      %v316 = vadd.s32 %v307, 72
      %v317 = vadd.s32 %v307, 80
      %v318 = vadd.s32 %v307, 88
      %v319 = vadd.s32 %v307, 96
      %v320 = vadd.s32 %v307, 104
      %v321 = vadd.s32 %v307, 112
      %v322 = vadd.s32 %v307, 120
      %s323 = smul.u32 0, 128
      %v324 = vstv %s323
      %v325 = vadd.s32 %v307, %v324
      %v326 = vadd.s32 %v308, %v324
      %v327 = vadd.s32 %v309, %v324
      %v328 = vadd.s32 %v310, %v324
      %v329 = vadd.s32 %v311, %v324
      %v330 = vadd.s32 %v312, %v324
      %v331 = vadd.s32 %v313, %v324
      %v332 = vadd.s32 %v314, %v324
      %v333 = vadd.s32 %v315, %v324
      %v334 = vadd.s32 %v316, %v324
      %v335 = vadd.s32 %v317, %v324
      %v336 = vadd.s32 %v318, %v324
      %v337 = vadd.s32 %v319, %v324
      %v338 = vadd.s32 %v320, %v324
      %v339 = vadd.s32 %v321, %v324
      %v340 = vadd.s32 %v322, %v324
      %v341 = vsel %vm305, %v287, -inf
      %v342 = vsel %vm305, %v288, -inf
      %v343 = vsel %vm305, %v289, -inf
      %v344 = vsel %vm305, %v290, -inf
      %v345 = vsel %vm305, %v291, -inf
      %v346 = vsel %vm305, %v292, -inf
      %v347 = vsel %vm305, %v293, -inf
      %v348 = vsel %vm305, %v294, -inf
      %v349 = vsel %vm305, %v295, -inf
      %v350 = vsel %vm305, %v296, -inf
      %v351 = vsel %vm305, %v297, -inf
      %v352 = vsel %vm305, %v298, -inf
      %v353 = vsel %vm305, %v299, -inf
      %v354 = vsel %vm305, %v300, -inf
      %v355 = vsel %vm305, %v301, -inf
      %v356 = vsel %vm305, %v302, -inf
      %357 = vmax.xlane.f32.xlu0 %v341
      %v358 = vpop.xlane.xlu0 %357
      %359 = vmax.xlane.f32.xlu0 %v342
      %v360 = vpop.xlane.xlu0 %359
      %361 = vmax.xlane.f32.xlu0 %v343
      %v362 = vpop.xlane.xlu0 %361
      %363 = vmax.xlane.f32.xlu0 %v344
      %v364 = vpop.xlane.xlu0 %363
      %365 = vmax.xlane.f32.xlu0 %v345
      %v366 = vpop.xlane.xlu0 %365
      %367 = vmax.xlane.f32.xlu0 %v346
      %v368 = vpop.xlane.xlu0 %367
      %369 = vmax.xlane.f32.xlu0 %v347
      %v370 = vpop.xlane.xlu0 %369
      %371 = vmax.xlane.f32.xlu0 %v348
      %v372 = vpop.xlane.xlu0 %371
      %373 = vmax.xlane.f32.xlu0 %v349
      %v374 = vpop.xlane.xlu0 %373
      %375 = vmax.xlane.f32.xlu0 %v350
      %v376 = vpop.xlane.xlu0 %375
      %377 = vmax.xlane.f32.xlu0 %v351
      %v378 = vpop.xlane.xlu0 %377
      %379 = vmax.xlane.f32.xlu0 %v352
      %v380 = vpop.xlane.xlu0 %379
      %381 = vmax.xlane.f32.xlu0 %v353
      %v382 = vpop.xlane.xlu0 %381
      %383 = vmax.xlane.f32.xlu0 %v354
      %v384 = vpop.xlane.xlu0 %383
      %385 = vmax.xlane.f32.xlu0 %v355
      %v386 = vpop.xlane.xlu0 %385
      %387 = vmax.xlane.f32.xlu0 %v356
      %v388 = vpop.xlane.xlu0 %387
      %v389 = vsub.f32 %v341, %v358
      %v390 = vsub.f32 %v342, %v360
      %v391 = vsub.f32 %v343, %v362
      %v392 = vsub.f32 %v344, %v364
      %v393 = vsub.f32 %v345, %v366
      %v394 = vsub.f32 %v346, %v368
      %v395 = vsub.f32 %v347, %v370
      %v396 = vsub.f32 %v348, %v372
      %v397 = vsub.f32 %v349, %v374
      %v398 = vsub.f32 %v350, %v376
      %v399 = vsub.f32 %v351, %v378
      %v400 = vsub.f32 %v352, %v380
      %v401 = vsub.f32 %v353, %v382
      %v402 = vsub.f32 %v354, %v384
      %v403 = vsub.f32 %v355, %v386
      %v404 = vsub.f32 %v356, %v388
      %v405 = vmul.f32 %v389, 1.442695
      %v406 = vpow.pop %v405
      %v407 = vmul.f32 %v390, 1.442695
      %v408 = vpow.pop %v407
      %v409 = vmul.f32 %v391, 1.442695
      %v410 = vpow.pop %v409
      %v411 = vmul.f32 %v392, 1.442695
      %v412 = vpow.pop %v411
      %v413 = vmul.f32 %v393, 1.442695
      %v414 = vpow.pop %v413
      %v415 = vmul.f32 %v394, 1.442695
      %v416 = vpow.pop %v415
      %v417 = vmul.f32 %v395, 1.442695
      %v418 = vpow.pop %v417
      %v419 = vmul.f32 %v396, 1.442695
      %v420 = vpow.pop %v419
      %v421 = vmul.f32 %v397, 1.442695
      %v422 = vpow.pop %v421
      %v423 = vmul.f32 %v398, 1.442695
      %v424 = vpow.pop %v423
      %v425 = vmul.f32 %v399, 1.442695
      %v426 = vpow.pop %v425
      %v427 = vmul.f32 %v400, 1.442695
      %v428 = vpow.pop %v427
      %v429 = vmul.f32 %v401, 1.442695
      %v430 = vpow.pop %v429
      %v431 = vmul.f32 %v402, 1.442695
      %v432 = vpow.pop %v431
      %v433 = vmul.f32 %v403, 1.442695
      %v434 = vpow.pop %v433
      %v435 = vmul.f32 %v404, 1.442695
      %v436 = vpow.pop %v435
      %437 = vadd.xlane.f32.xlu0 %v406
      %v438 = vpop.xlane.xlu0 %437
      %439 = vadd.xlane.f32.xlu0 %v408
      %v440 = vpop.xlane.xlu0 %439
      %441 = vadd.xlane.f32.xlu0 %v410
      %v442 = vpop.xlane.xlu0 %441
      %443 = vadd.xlane.f32.xlu0 %v412
      %v444 = vpop.xlane.xlu0 %443
      %445 = vadd.xlane.f32.xlu0 %v414
      %v446 = vpop.xlane.xlu0 %445
      %447 = vadd.xlane.f32.xlu0 %v416
      %v448 = vpop.xlane.xlu0 %447
      %449 = vadd.xlane.f32.xlu0 %v418
      %v450 = vpop.xlane.xlu0 %449
      %451 = vadd.xlane.f32.xlu0 %v420
      %v452 = vpop.xlane.xlu0 %451
      %453 = vadd.xlane.f32.xlu0 %v422
      %v454 = vpop.xlane.xlu0 %453
      %455 = vadd.xlane.f32.xlu0 %v424
      %v456 = vpop.xlane.xlu0 %455
      %457 = vadd.xlane.f32.xlu0 %v426
      %v458 = vpop.xlane.xlu0 %457
      %459 = vadd.xlane.f32.xlu0 %v428
      %v460 = vpop.xlane.xlu0 %459
      %461 = vadd.xlane.f32.xlu0 %v430
      %v462 = vpop.xlane.xlu0 %461
      %463 = vadd.xlane.f32.xlu0 %v432
      %v464 = vpop.xlane.xlu0 %463
      %465 = vadd.xlane.f32.xlu0 %v434
      %v466 = vpop.xlane.xlu0 %465
      %467 = vadd.xlane.f32.xlu0 %v436
      %v468 = vpop.xlane.xlu0 %467
      %v469 = vrcp.pop %v438
      %v470 = vrcp.pop %v440
      %v471 = vrcp.pop %v442
      %v472 = vrcp.pop %v444
      %v473 = vrcp.pop %v446
      %v474 = vrcp.pop %v448
      %v475 = vrcp.pop %v450
      %v476 = vrcp.pop %v452
      %v477 = vrcp.pop %v454
      %v478 = vrcp.pop %v456
      %v479 = vrcp.pop %v458
      %v480 = vrcp.pop %v460
      %v481 = vrcp.pop %v462
      %v482 = vrcp.pop %v464
      %v483 = vrcp.pop %v466
      %v484 = vrcp.pop %v468
      %v485 = vmul.f32 %v406, %v469
      %v486 = vmul.f32 %v408, %v470
      %v487 = vmul.f32 %v410, %v471
      %v488 = vmul.f32 %v412, %v472
      %v489 = vmul.f32 %v414, %v473
      %v490 = vmul.f32 %v416, %v474
      %v491 = vmul.f32 %v418, %v475
      %v492 = vmul.f32 %v420, %v476
      %v493 = vmul.f32 %v422, %v477
      %v494 = vmul.f32 %v424, %v478
      %v495 = vmul.f32 %v426, %v479
      %v496 = vmul.f32 %v428, %v480
      %v497 = vmul.f32 %v430, %v481
      %v498 = vmul.f32 %v432, %v482
      %v499 = vmul.f32 %v434, %v483
      %v500 = vmul.f32 %v436, %v484
      %v501 = vmul.f32 %v485, 1.442695
      %v502 = vpow.pop %v501
      %v503 = vmul.f32 %v486, 1.442695
      %v504 = vpow.pop %v503
      %v505 = vmul.f32 %v487, 1.442695
      %v506 = vpow.pop %v505
      %v507 = vmul.f32 %v488, 1.442695
      %v508 = vpow.pop %v507
      %v509 = vmul.f32 %v489, 1.442695
      %v510 = vpow.pop %v509
      %v511 = vmul.f32 %v490, 1.442695
      %v512 = vpow.pop %v511
      %v513 = vmul.f32 %v491, 1.442695
      %v514 = vpow.pop %v513
      %v515 = vmul.f32 %v492, 1.442695
      %v516 = vpow.pop %v515
      %v517 = vmul.f32 %v493, 1.442695
      %v518 = vpow.pop %v517
      %v519 = vmul.f32 %v494, 1.442695
      %v520 = vpow.pop %v519
      %v521 = vmul.f32 %v495, 1.442695
      %v522 = vpow.pop %v521
      %v523 = vmul.f32 %v496, 1.442695
      %v524 = vpow.pop %v523
      %v525 = vmul.f32 %v497, 1.442695
      %v526 = vpow.pop %v525
      %v527 = vmul.f32 %v498, 1.442695
      %v528 = vpow.pop %v527
      %v529 = vmul.f32 %v499, 1.442695
      %v530 = vpow.pop %v529
      %v531 = vmul.f32 %v500, 1.442695
      %v532 = vpow.pop %v531
      %v533 = vsel %vm305, %v502, 0.0
      %v534 = vsel %vm305, %v504, 0.0
      %v535 = vsel %vm305, %v506, 0.0
      %v536 = vsel %vm305, %v508, 0.0
      %v537 = vsel %vm305, %v510, 0.0
      %v538 = vsel %vm305, %v512, 0.0
      %v539 = vsel %vm305, %v514, 0.0
      %v540 = vsel %vm305, %v516, 0.0
      %v541 = vsel %vm305, %v518, 0.0
      %v542 = vsel %vm305, %v520, 0.0
      %v543 = vsel %vm305, %v522, 0.0
      %v544 = vsel %vm305, %v524, 0.0
      %v545 = vsel %vm305, %v526, 0.0
      %v546 = vsel %vm305, %v528, 0.0
      %v547 = vsel %vm305, %v530, 0.0
      %v548 = vsel %vm305, %v532, 0.0
      %549 = vadd.xlane.f32.xlu0 %v533
      %v550 = vpop.xlane.xlu0 %549
      %551 = vadd.xlane.f32.xlu0 %v534
      %v552 = vpop.xlane.xlu0 %551
      %553 = vadd.xlane.f32.xlu0 %v535
      %v554 = vpop.xlane.xlu0 %553
      %555 = vadd.xlane.f32.xlu0 %v536
      %v556 = vpop.xlane.xlu0 %555
      %557 = vadd.xlane.f32.xlu0 %v537
      %v558 = vpop.xlane.xlu0 %557
      %559 = vadd.xlane.f32.xlu0 %v538
      %v560 = vpop.xlane.xlu0 %559
      %561 = vadd.xlane.f32.xlu0 %v539
      %v562 = vpop.xlane.xlu0 %561
      %563 = vadd.xlane.f32.xlu0 %v540
      %v564 = vpop.xlane.xlu0 %563
      %565 = vadd.xlane.f32.xlu0 %v541
      %v566 = vpop.xlane.xlu0 %565
      %567 = vadd.xlane.f32.xlu0 %v542
      %v568 = vpop.xlane.xlu0 %567
      %569 = vadd.xlane.f32.xlu0 %v543
      %v570 = vpop.xlane.xlu0 %569
      %571 = vadd.xlane.f32.xlu0 %v544
      %v572 = vpop.xlane.xlu0 %571
      %573 = vadd.xlane.f32.xlu0 %v545
      %v574 = vpop.xlane.xlu0 %573
      %575 = vadd.xlane.f32.xlu0 %v546
      %v576 = vpop.xlane.xlu0 %575
      %577 = vadd.xlane.f32.xlu0 %v547
      %v578 = vpop.xlane.xlu0 %577
      %579 = vadd.xlane.f32.xlu0 %v548
      %v580 = vpop.xlane.xlu0 %579
      %v581 = vlog2.pop %v550
      %v582 = vmul.f32 %v581, 0.6931472
      %v583 = vlog2.pop %v552
      %v584 = vmul.f32 %v583, 0.6931472
      %v585 = vlog2.pop %v554
      %v586 = vmul.f32 %v585, 0.6931472
      %v587 = vlog2.pop %v556
      %v588 = vmul.f32 %v587, 0.6931472
      %v589 = vlog2.pop %v558
      %v590 = vmul.f32 %v589, 0.6931472
      %v591 = vlog2.pop %v560
      %v592 = vmul.f32 %v591, 0.6931472
      %v593 = vlog2.pop %v562
      %v594 = vmul.f32 %v593, 0.6931472
      %v595 = vlog2.pop %v564
      %v596 = vmul.f32 %v595, 0.6931472
      %v597 = vlog2.pop %v566
      %v598 = vmul.f32 %v597, 0.6931472
      %v599 = vlog2.pop %v568
      %v600 = vmul.f32 %v599, 0.6931472
      %v601 = vlog2.pop %v570
      %v602 = vmul.f32 %v601, 0.6931472
      %v603 = vlog2.pop %v572
      %v604 = vmul.f32 %v603, 0.6931472
      %v605 = vlog2.pop %v574
      %v606 = vmul.f32 %v605, 0.6931472
      %v607 = vlog2.pop %v576
      %v608 = vmul.f32 %v607, 0.6931472
      %v609 = vlog2.pop %v578
      %v610 = vmul.f32 %v609, 0.6931472
      %v611 = vlog2.pop %v580
      %v612 = vmul.f32 %v611, 0.6931472
      %vm613 = vcmp.eq.s32.totalorder %v304, %v325
      %vm614 = vcmp.eq.s32.totalorder %v304, %v326
      %vm615 = vcmp.eq.s32.totalorder %v304, %v327
      %vm616 = vcmp.eq.s32.totalorder %v304, %v328
      %vm617 = vcmp.eq.s32.totalorder %v304, %v329
      %vm618 = vcmp.eq.s32.totalorder %v304, %v330
      %vm619 = vcmp.eq.s32.totalorder %v304, %v331
      %vm620 = vcmp.eq.s32.totalorder %v304, %v332
      %vm621 = vcmp.eq.s32.totalorder %v304, %v333
      %vm622 = vcmp.eq.s32.totalorder %v304, %v334
      %vm623 = vcmp.eq.s32.totalorder %v304, %v335
      %vm624 = vcmp.eq.s32.totalorder %v304, %v336
      %vm625 = vcmp.eq.s32.totalorder %v304, %v337
      %vm626 = vcmp.eq.s32.totalorder %v304, %v338
      %vm627 = vcmp.eq.s32.totalorder %v304, %v339
      %vm628 = vcmp.eq.s32.totalorder %v304, %v340
      %v629 = vsel %vm613, %v406, 0.0
      %v630 = vsel %vm614, %v408, 0.0
      %v631 = vsel %vm615, %v410, 0.0
      %v632 = vsel %vm616, %v412, 0.0
      %v633 = vsel %vm617, %v414, 0.0
      %v634 = vsel %vm618, %v416, 0.0
      %v635 = vsel %vm619, %v418, 0.0
      %v636 = vsel %vm620, %v420, 0.0
      %v637 = vsel %vm621, %v422, 0.0
      %v638 = vsel %vm622, %v424, 0.0
      %v639 = vsel %vm623, %v426, 0.0
      %v640 = vsel %vm624, %v428, 0.0
      %v641 = vsel %vm625, %v430, 0.0
      %v642 = vsel %vm626, %v432, 0.0
      %v643 = vsel %vm627, %v434, 0.0
      %v644 = vsel %vm628, %v436, 0.0
      %645 = vadd.xlane.f32.xlu0 %v629
      %v646 = vpop.xlane.xlu0 %645
      %647 = vadd.xlane.f32.xlu0 %v630
      %v648 = vpop.xlane.xlu0 %647
      %649 = vadd.xlane.f32.xlu0 %v631
      %v650 = vpop.xlane.xlu0 %649
      %651 = vadd.xlane.f32.xlu0 %v632
      %v652 = vpop.xlane.xlu0 %651
      %653 = vadd.xlane.f32.xlu0 %v633
      %v654 = vpop.xlane.xlu0 %653
      %655 = vadd.xlane.f32.xlu0 %v634
      %v656 = vpop.xlane.xlu0 %655
      %657 = vadd.xlane.f32.xlu0 %v635
      %v658 = vpop.xlane.xlu0 %657
      %659 = vadd.xlane.f32.xlu0 %v636
      %v660 = vpop.xlane.xlu0 %659
      %661 = vadd.xlane.f32.xlu0 %v637
      %v662 = vpop.xlane.xlu0 %661
      %663 = vadd.xlane.f32.xlu0 %v638
      %v664 = vpop.xlane.xlu0 %663
      %665 = vadd.xlane.f32.xlu0 %v639
      %v666 = vpop.xlane.xlu0 %665
      %667 = vadd.xlane.f32.xlu0 %v640
      %v668 = vpop.xlane.xlu0 %667
      %669 = vadd.xlane.f32.xlu0 %v641
      %v670 = vpop.xlane.xlu0 %669
      %671 = vadd.xlane.f32.xlu0 %v642
      %v672 = vpop.xlane.xlu0 %671
      %673 = vadd.xlane.f32.xlu0 %v643
      %v674 = vpop.xlane.xlu0 %673
      %675 = vadd.xlane.f32.xlu0 %v644
      %v676 = vpop.xlane.xlu0 %675
      %v677 = vmul.f32 %v646, %v469
      %v678 = vmul.f32 %v648, %v470
      %v679 = vmul.f32 %v650, %v471
      %v680 = vmul.f32 %v652, %v472
      %v681 = vmul.f32 %v654, %v473
      %v682 = vmul.f32 %v656, %v474
      %v683 = vmul.f32 %v658, %v475
      %v684 = vmul.f32 %v660, %v476
      %v685 = vmul.f32 %v662, %v477
      %v686 = vmul.f32 %v664, %v478
      %v687 = vmul.f32 %v666, %v479
      %v688 = vmul.f32 %v668, %v480
      %v689 = vmul.f32 %v670, %v481
      %v690 = vmul.f32 %v672, %v482
      %v691 = vmul.f32 %v674, %v483
      %v692 = vmul.f32 %v676, %v484
      %vm693 = vcmp.lt.s32.totalorder %v325, 8
      %vm694 = vcmp.lt.s32.totalorder %v326, 8
      %vm695 = vcmp.lt.s32.totalorder %v327, 8
      %vm696 = vcmp.lt.s32.totalorder %v328, 8
      %vm697 = vcmp.lt.s32.totalorder %v329, 8
      %vm698 = vcmp.lt.s32.totalorder %v330, 8
      %vm699 = vcmp.lt.s32.totalorder %v331, 8
      %vm700 = vcmp.lt.s32.totalorder %v332, 8
      %vm701 = vcmp.lt.s32.totalorder %v333, 8
      %vm702 = vcmp.lt.s32.totalorder %v334, 8
      %vm703 = vcmp.lt.s32.totalorder %v335, 8
      %vm704 = vcmp.lt.s32.totalorder %v336, 8
      %vm705 = vcmp.lt.s32.totalorder %v337, 8
      %vm706 = vcmp.lt.s32.totalorder %v338, 8
      %vm707 = vcmp.lt.s32.totalorder %v339, 8
      %vm708 = vcmp.lt.s32.totalorder %v340, 8
      %v709 = vsub.f32 %v582, %v677
      %v710 = vsub.f32 %v584, %v678
      %v711 = vsub.f32 %v586, %v679
      %v712 = vsub.f32 %v588, %v680
      %v713 = vsub.f32 %v590, %v681
      %v714 = vsub.f32 %v592, %v682
      %v715 = vsub.f32 %v594, %v683
      %v716 = vsub.f32 %v596, %v684
      %v717 = vsub.f32 %v598, %v685
      %v718 = vsub.f32 %v600, %v686
      %v719 = vsub.f32 %v602, %v687
      %v720 = vsub.f32 %v604, %v688
      %v721 = vsub.f32 %v606, %v689
      %v722 = vsub.f32 %v608, %v690
      %v723 = vsub.f32 %v610, %v691
      %v724 = vsub.f32 %v612, %v692
      %v725 = vsel %vm693, %v709, 0.0
      %v726 = vsel %vm694, %v710, 0.0
      %v727 = vsel %vm695, %v711, 0.0
      %v728 = vsel %vm696, %v712, 0.0
      %v729 = vsel %vm697, %v713, 0.0
      %v730 = vsel %vm698, %v714, 0.0
      %v731 = vsel %vm699, %v715, 0.0
      %v732 = vsel %vm700, %v716, 0.0
      %v733 = vsel %vm701, %v717, 0.0
      %v734 = vsel %vm702, %v718, 0.0
      %v735 = vsel %vm703, %v719, 0.0
      %v736 = vsel %vm704, %v720, 0.0
      %v737 = vsel %vm705, %v721, 0.0
      %v738 = vsel %vm706, %v722, 0.0
      %v739 = vsel %vm707, %v723, 0.0
      %v740 = vsel %vm708, %v724, 0.0
      %vm741 = vcmask 7168
      %742 = vst.msk [vmem:[%s2] sm:$0xff] %vm741, %v725
      %743 = vst.msk [vmem:[%s2 + $0x8] sm:$0xff] %vm741, %v726
      %744 = vst.msk [vmem:[%s2 + $0x10] sm:$0xff] %vm741, %v727
      %745 = vst.msk [vmem:[%s2 + $0x18] sm:$0xff] %vm741, %v728
      %746 = vst.msk [vmem:[%s2 + $0x20] sm:$0xff] %vm741, %v729
      %747 = vst.msk [vmem:[%s2 + $0x28] sm:$0xff] %vm741, %v730
      %748 = vst.msk [vmem:[%s2 + $0x30] sm:$0xff] %vm741, %v731
      %749 = vst.msk [vmem:[%s2 + $0x38] sm:$0xff] %vm741, %v732
      %750 = vst.msk [vmem:[%s2 + $0x40] sm:$0xff] %vm741, %v733
      %751 = vst.msk [vmem:[%s2 + $0x48] sm:$0xff] %vm741, %v734
      %752 = vst.msk [vmem:[%s2 + $0x50] sm:$0xff] %vm741, %v735
      %753 = vst.msk [vmem:[%s2 + $0x58] sm:$0xff] %vm741, %v736
      %754 = vst.msk [vmem:[%s2 + $0x60] sm:$0xff] %vm741, %v737
      %755 = vst.msk [vmem:[%s2 + $0x68] sm:$0xff] %vm741, %v738
      %756 = vst.msk [vmem:[%s2 + $0x70] sm:$0xff] %vm741, %v739
      %757 = vst.msk [vmem:[%s2 + $0x78] sm:$0xff] %vm741, %v740
    $region25: #{tpu_custom_call.1} parent=1 // pred_fallthru
      _
    // Predicated region
    $region26: #{tpu_custom_call.1} parent=1 // pred_check
      _
    $region27: #{tpu_custom_call.1} parent=1 // pred_check_branch
      %759 = sbr.rel (0) target = $region29
    $region28: #{tpu_custom_call.1} parent=1 // pred_region
      _
    $region29: #{tpu_custom_call.1} parent=1 // pred_fallthru
      _
    // Predicated region
    $region30: #{tpu_custom_call.1} parent=1 // pred_check
      _
    $region31: #{tpu_custom_call.1} parent=1 // pred_check_branch
      %761 = sbr.rel (0) target = $region33
    $region32: #{tpu_custom_call.1} parent=1 // pred_region
      _
    $region33: #{tpu_custom_call.1} parent=1 // pred_fallthru
      _
    %762 = vsyncpa [#allocation4], 1
    %763 = vsyncpa [#allocation6], 1

</llo_original>
